<compile_context>
chip_gen: v7x
topology: tpu7x:2x2x1
jax: 0.10.0
libtpu: 0.0.40
codegen_flags: <defaults>
</compile_context>

<pallas_src>
import functools

import jax
import jax.numpy as jnp
import numpy as np
from jax.experimental import pallas as pl
from jax.experimental.pallas import tpu as pltpu

DIM = 128          # Linear/LayerNorm feature dim (lane-aligned: multiple of 128)
BATCH = 256        # total rows
_LN_EPS = 1e-5     # torch.nn.LayerNorm default eps


def _num_tensorcores():
    """2 for v7x-class chips (megacore via 'parallel' grid sharding), else 1."""
    try:
        kind = jax.devices()[0].device_kind.lower()
    except Exception:
        return 1
    return 2 if "v7" in kind else 1


def _pick_block_b(batch):
    n_tc = _num_tensorcores()
    if n_tc > 1 and batch % n_tc == 0 and (batch // n_tc) % 8 == 0:
        return batch // n_tc          # one block per TensorCore on v7x
    return batch                      # single grid step on 1-TC chips (v5e/v6e)


# ---------------- Pallas kernel ---------------------------------------------------
def _residual_block_kernel(x_ref, w_ref, vec_ref, o_ref):
    """x_ref: (BLOCK_B, DIM) f32 | w_ref: (DIM, DIM) f32 [in, out] |
       vec_ref: (3, DIM) f32 rows = (bias, 0.1*ln_gamma, 0.1*ln_beta) |
       o_ref: (BLOCK_B, DIM) f32."""
    x = x_ref[...]
    bias = vec_ref[0:1, :]        # (1, DIM) -> sublane broadcast
    gamma01 = vec_ref[1:2, :]     # 0.1 * gamma (residual scale pre-folded)
    beta01 = vec_ref[2:3, :]      # 0.1 * beta

    # Linear(dim, dim): f32 MXU matmul + f32 bias.
    h = jnp.dot(x, w_ref[...], preferred_element_type=jnp.float32) + bias
    # LeakyReLU(0.2)
    h = jnp.where(h >= 0, h, 0.2 * h)
    # LayerNorm(dim): one-pass stats (two independent lane reductions).
    inv_d = 1.0 / h.shape[-1]
    s1 = jnp.sum(h, axis=-1, keepdims=True)
    s2 = jnp.sum(h * h, axis=-1, keepdims=True)
    mu = s1 * inv_d
    var = s2 * inv_d - mu * mu                      # biased variance (matches torch LN)
    h = (h - mu) * jax.lax.rsqrt(var + _LN_EPS) * gamma01 + beta01
    # Dropout(0.1) is identity in eval mode.
    # TODO(synk): training-mode Dropout would need pltpu.prng_seed / prng_random_bits masking.
    # Residual: 0.1 scale already folded into gamma01/beta01.
    o_ref[...] = x + h


def residual_block_forward(x, w, vec_params):
    B, D = x.shape
    assert D == DIM
    block_b = _pick_block_b(B)
    return pl.pallas_call(
        _residual_block_kernel,
        out_shape=jax.ShapeDtypeStruct((B, D), jnp.float32),
        grid_spec=pltpu.PrefetchScalarGridSpec(
            num_scalar_prefetch=0,
            grid=(B // block_b,),
            in_specs=[
                pl.BlockSpec((block_b, D), lambda i: (i, 0)),   # x: tiled over batch
                pl.BlockSpec((D, D), lambda i: (0, 0)),         # weight: VMEM-resident
                pl.BlockSpec((3, D), lambda i: (0, 0)),         # packed bias / 0.1*gamma / 0.1*beta
            ],
            out_specs=pl.BlockSpec((block_b, D), lambda i: (i, 0)),
        ),
        compiler_params=pltpu.CompilerParams(
            dimension_semantics=("parallel",),                  # shards the 2 blocks across v7x TCs
        ),
    )(x, w, vec_params)


# ---------------- reference (full-f32 PyTorch-module semantics) --------------------
def _reference_f32(x, w, bias, gamma, beta):
    h = jnp.dot(x, w, preferred_element_type=jnp.float32) + bias
    h = jnp.where(h >= 0, h, 0.2 * h)
    mu = jnp.mean(h, axis=-1, keepdims=True)
    var = jnp.mean(jnp.square(h - mu), axis=-1, keepdims=True)
    h = (h - mu) * jax.lax.rsqrt(var + _LN_EPS) * gamma + beta
    return x + 0.1 * h


# ---------------- main -------------------------------------------------------------
if __name__ == "__main__":
    key = jax.random.PRNGKey(0)
    kx, kw, kb, kg, kbt = jax.random.split(key, 5)

    x = jax.random.normal(kx, (BATCH, DIM), jnp.float32)

    # nn.Linear default init: U(-1/sqrt(dim), 1/sqrt(dim)); weight stored [in, out]
    bound = 1.0 / (DIM ** 0.5)
    w = jax.random.uniform(kw, (DIM, DIM), jnp.float32, -bound, bound)
    bias = jax.random.uniform(kb, (1, DIM), jnp.float32, -bound, bound)
    gamma = 1.0 + 0.1 * jax.random.normal(kg, (1, DIM), jnp.float32)   # non-trivial LN affine
    beta = 0.05 * jax.random.normal(kbt, (1, DIM), jnp.float32)

    # One-time parameter prep: fold the 0.1 residual scale into the LN affine,
    # pack (bias, 0.1*gamma, 0.1*beta) into one (3, DIM) buffer -> single DMA.
    vec_params = jnp.concatenate([bias, 0.1 * gamma, 0.1 * beta], axis=0)

    run = jax.jit(residual_block_forward)
    out = run(x, w, vec_params)
    jax.block_until_ready(out)

    assert out.shape == (BATCH, DIM) and out.dtype == jnp.float32

    ref = _reference_f32(x, w, bias, gamma, beta)
    np.testing.assert_allclose(np.asarray(out), np.asarray(ref), rtol=1e-4, atol=1e-4)

    print("KERNEL_OK")
</pallas_src>

<mosaic_0001>
module attributes {stable_mosaic.version = 11 : i64} {
  func.func @_residual_block_kernel(%arg0: i32, %arg1: memref<256x128xf32, #tpu.memory_space<vmem>>, %arg2: memref<128x128xf32, #tpu.memory_space<vmem>>, %arg3: memref<3x128xf32, #tpu.memory_space<vmem>>, %arg4: memref<256x128xf32, #tpu.memory_space<vmem>>) attributes {dimension_semantics = [#tpu.dimension_semantics<parallel>], iteration_bounds = array<i64: 1>, scalar_prefetch = 0 : i64, scratch_operands = 0 : i64, tpu.core_type = #tpu.core_type<tc>, window_params = [{transform_indices = @transform_0, window_bounds = array<i64: 256, 128>}, {pipeline_mode = #tpu.pipeline_mode<synchronous>, transform_indices = @transform_1, window_bounds = array<i64: 128, 128>}, {pipeline_mode = #tpu.pipeline_mode<synchronous>, transform_indices = @transform_2, window_bounds = array<i64: 3, 128>}, {transform_indices = @transform_3, window_bounds = array<i64: 256, 128>}]} {
    %c0 = arith.constant 0 : index
    %c0_0 = arith.constant 0 : index
    %0 = vector.load %arg1[%c0, %c0_0] : memref<256x128xf32, #tpu.memory_space<vmem>>, vector<256x128xf32>
    %c0_1 = arith.constant 0 : index
    %c0_2 = arith.constant 0 : index
    %1 = vector.load %arg3[%c0_1, %c0_2] : memref<3x128xf32, #tpu.memory_space<vmem>>, vector<1x128xf32>
    %c1 = arith.constant 1 : index
    %c0_3 = arith.constant 0 : index
    %2 = vector.load %arg3[%c1, %c0_3] : memref<3x128xf32, #tpu.memory_space<vmem>>, vector<1x128xf32>
    %c2 = arith.constant 2 : index
    %c0_4 = arith.constant 0 : index
    %3 = vector.load %arg3[%c2, %c0_4] : memref<3x128xf32, #tpu.memory_space<vmem>>, vector<1x128xf32>
    %c0_5 = arith.constant 0 : index
    %c0_6 = arith.constant 0 : index
    %4 = vector.load %arg2[%c0_5, %c0_6] : memref<128x128xf32, #tpu.memory_space<vmem>>, vector<128x128xf32>
    %cst = arith.constant dense<0.000000e+00> : vector<256x128xf32>
    %5 = tpu.matmul %0, %4, %cst {dimension_numbers = #tpu.dot_dimension_numbers<[1], [0], [0], [1], [0, 0, 1, 1], [], []>} : vector<256x128xf32>, vector<128x128xf32>, vector<256x128xf32> -> vector<256x128xf32>
    %6 = vector.broadcast %1 : vector<1x128xf32> to vector<256x128xf32>
    %7 = arith.addf %5, %6 : vector<256x128xf32>
    %cst_7 = arith.constant 0.000000e+00 : f32
    %8 = vector.broadcast %cst_7 : f32 to vector<256x128xf32>
    %9 = arith.cmpf oge, %7, %8 : vector<256x128xf32>
    %cst_8 = arith.constant 2.000000e-01 : f32
    %10 = vector.broadcast %cst_8 : f32 to vector<256x128xf32>
    %11 = arith.mulf %10, %7 : vector<256x128xf32>
    %12 = arith.select %9, %7, %11 : vector<256x128xi1>, vector<256x128xf32>
    %cst_9 = arith.constant dense<0.000000e+00> : vector<256xf32>
    %13 = vector.multi_reduction <add>, %12, %cst_9 [1] : vector<256x128xf32> to vector<256xf32>
    %14 = vector.shape_cast %13 : vector<256xf32> to vector<256x1xf32>
    %15 = arith.mulf %12, %12 : vector<256x128xf32>
    %cst_10 = arith.constant dense<0.000000e+00> : vector<256xf32>
    %16 = vector.multi_reduction <add>, %15, %cst_10 [1] : vector<256x128xf32> to vector<256xf32>
    %17 = vector.shape_cast %16 : vector<256xf32> to vector<256x1xf32>
    %cst_11 = arith.constant 7.812500e-03 : f32
    %18 = vector.broadcast %cst_11 : f32 to vector<256x1xf32>
    %19 = arith.mulf %14, %18 : vector<256x1xf32>
    %cst_12 = arith.constant 7.812500e-03 : f32
    %20 = vector.broadcast %cst_12 : f32 to vector<256x1xf32>
    %21 = arith.mulf %17, %20 : vector<256x1xf32>
    %22 = arith.mulf %19, %19 : vector<256x1xf32>
    %23 = arith.subf %21, %22 : vector<256x1xf32>
    %24 = vector.broadcast %19 : vector<256x1xf32> to vector<256x128xf32>
    %25 = arith.subf %12, %24 : vector<256x128xf32>
    %cst_13 = arith.constant 9.99999974E-6 : f32
    %26 = vector.broadcast %cst_13 : f32 to vector<256x1xf32>
    %27 = arith.addf %23, %26 : vector<256x1xf32>
    %28 = math.rsqrt %27 : vector<256x1xf32>
    %29 = vector.broadcast %28 : vector<256x1xf32> to vector<256x128xf32>
    %30 = arith.mulf %25, %29 : vector<256x128xf32>
    %31 = vector.broadcast %2 : vector<1x128xf32> to vector<256x128xf32>
    %32 = arith.mulf %30, %31 : vector<256x128xf32>
    %33 = vector.broadcast %3 : vector<1x128xf32> to vector<256x128xf32>
    %34 = arith.addf %32, %33 : vector<256x128xf32>
    %35 = arith.addf %0, %34 : vector<256x128xf32>
    %c0_14 = arith.constant 0 : index
    %c0_15 = arith.constant 0 : index
    %36 = vector.load %arg4[%c0_14, %c0_15] : memref<256x128xf32, #tpu.memory_space<vmem>>, vector<256x128xf32>
    tpu.vector_store %arg4[%c0_14, %c0_15], %35 {strides = array<i32>} : memref<256x128xf32, #tpu.memory_space<vmem>>, vector<256x128xf32>,
    return
  }
  func.func @transform_0(%arg0: i32) -> (i32, i32) {
    %c0_i32 = arith.constant 0 : i32
    %c0_i32_0 = arith.constant 0 : i32
    return %arg0, %c0_i32 : i32, i32
  }
  func.func @transform_1(%arg0: i32) -> (i32, i32) {
    %c0_i32 = arith.constant 0 : i32
    %c0_i32_0 = arith.constant 0 : i32
    %c0_i32_1 = arith.constant 0 : i32
    return %c0_i32, %c0_i32_0 : i32, i32
  }
  func.func @transform_2(%arg0: i32) -> (i32, i32) {
    %c0_i32 = arith.constant 0 : i32
    %c0_i32_0 = arith.constant 0 : i32
    %c0_i32_1 = arith.constant 0 : i32
    return %c0_i32, %c0_i32_0 : i32, i32
  }
  func.func @transform_3(%arg0: i32) -> (i32, i32) {
    %c0_i32 = arith.constant 0 : i32
    %c0_i32_0 = arith.constant 0 : i32
    return %arg0, %c0_i32 : i32, i32
  }
}

</mosaic_0001>

<llo_original>
// kernel: residual_block_forward.1
$region0: #{residual_block_forward.1}
  #allocation0 [shape = 'u32[]', space=smem, size = 0x4, offset = 0x4, fixed_abs, tag = 'smem constant byte address 0x4 - core index']
  #allocation1 [shape = 'u32[144,128]{1,0:T(1,128)}', space=vmem, size = 0x12000, scoped, tag = 'internal scratch']
  %s0 = inlined_call_operand.hbm [shape: f32[256,128], index: 0, kind: input, shape index: {}]
  %s1 = inlined_call_operand.hbm [shape: f32[128,128], index: 1, kind: input, shape index: {}]
  %s2 = inlined_call_operand.vmem [shape: f32[3,128], index: 2, kind: input, shape index: {}]
  %s3 = inlined_call_operand.hbm [shape: f32[256,128], index: 3, kind: output, shape index: {}]
  %s4 = sld [smem:[#allocation0]]
  $region30: #{residual_block_forward.1} parent=0
    _
  %s6 = ssub.s32 1, %s4
  %s7 = scalar_select 0, %s6, %s4
  $region1: #{residual_block_forward.1} parent=0
    #allocation2 [shape = 'u8[131072]{0}', space=vmem, size = 0x20000, scoped, tag = 'input window, operand 0, single buffered']
    #allocation3 [shape = 's32[1]{0}', space=sflag, size = 0x4, scoped, tag = 'scoped memory for residual_block_forward.1']
    #allocation4 [shape = 's32[1]{0}', space=sflag, size = 0x4, scoped, tag = 'scoped memory for residual_block_forward.1']
    #allocation5 [shape = 'u8[65536]{0}', space=vmem, size = 0x10000, scoped, tag = 'input window, operand 1, single buffered']
    #allocation6 [shape = 's32[1]{0}', space=sflag, size = 0x4, scoped, tag = 'scoped memory for residual_block_forward.1']
    #allocation7 [shape = 'u8[131072]{0}', space=vmem, size = 0x20000, scoped, tag = 'output window, operand 0, single buffered']
    %8 = vsyncpa [#allocation3], 0
    %9 = vsyncpa [#allocation6], 0
    %10 = vsyncpa [#allocation4], 0
    // Predicated region
    $region2: #{residual_block_forward.1} parent=1 // pred_check
      _
    $region3: #{residual_block_forward.1} parent=1 // pred_check_branch
      %12 = sbr.rel (0) target = $region5
    $region4: #{residual_block_forward.1} parent=1 // pred_region
      %s14 = ssub.s32 4096, 4096
      %15 = vsyncadd [#allocation3], %s14
      %s16 = sshll.u32 [#allocation2], 4
      %s17 = int_to_ptr.vmem [resolvable:$true] %s16
      %22 = dma.hbm_to_vmem [thread:$0]  %s0, 4096, %s17, [#allocation3], 128, 128, 8
    $region5: #{residual_block_forward.1} parent=1 // pred_fallthru
      _
    // Predicated region
    $region6: #{residual_block_forward.1} parent=1 // pred_check
      _
    $region7: #{residual_block_forward.1} parent=1 // pred_check_branch
      %24 = sbr.rel (0) target = $region9
    $region8: #{residual_block_forward.1} parent=1 // pred_region
      %s26 = ssub.s32 2048, 2048
      %27 = vsyncadd [#allocation6], %s26
      %s28 = sshll.u32 [#allocation5], 4
      %s29 = int_to_ptr.vmem [resolvable:$true] %s28
      %34 = dma.hbm_to_vmem [thread:$0]  %s1, 2048, %s29, [#allocation6], 128, 128, 8
    $region9: #{residual_block_forward.1} parent=1 // pred_fallthru
      _
    // Predicated region
    $region10: #{residual_block_forward.1} parent=1 // pred_check
      _
    $region11: #{residual_block_forward.1} parent=1 // pred_check_branch
      %36 = sbr.rel (0) target = $region13
    $region12: #{residual_block_forward.1} parent=1 // pred_region
      _
    $region13: #{residual_block_forward.1} parent=1 // pred_fallthru
      _
    // Predicated region
    $region14: #{residual_block_forward.1} parent=1 // pred_check
      _
    $region15: #{residual_block_forward.1} parent=1 // pred_check_branch
      %38 = sbr.rel (0) target = $region17
    $region16: #{residual_block_forward.1} parent=1 // pred_region
      %39 = dma.done [#allocation3], 4096
    $region17: #{residual_block_forward.1} parent=1 // pred_fallthru
      _
    // Predicated region
    $region18: #{residual_block_forward.1} parent=1 // pred_check
      _
    $region19: #{residual_block_forward.1} parent=1 // pred_check_branch
      %41 = sbr.rel (0) target = $region21
    $region20: #{residual_block_forward.1} parent=1 // pred_region
      %42 = dma.done [#allocation6], 2048
    $region21: #{residual_block_forward.1} parent=1 // pred_fallthru
      _
    %v43 = vld [vmem:[#allocation2] sm:$0xff]
    %v44 = vld [vmem:[#allocation2 + $0x8] sm:$0xff]
    %v45 = vld [vmem:[#allocation2 + $0x10] sm:$0xff]
    %v46 = vld [vmem:[#allocation2 + $0x18] sm:$0xff]
    %v47 = vld [vmem:[#allocation2 + $0x20] sm:$0xff]
    %v48 = vld [vmem:[#allocation2 + $0x28] sm:$0xff]
    %v49 = vld [vmem:[#allocation2 + $0x30] sm:$0xff]
    %v50 = vld [vmem:[#allocation2 + $0x38] sm:$0xff]
    %v51 = vld [vmem:[#allocation2 + $0x40] sm:$0xff]
    %v52 = vld [vmem:[#allocation2 + $0x48] sm:$0xff]
    %v53 = vld [vmem:[#allocation2 + $0x50] sm:$0xff]
    %v54 = vld [vmem:[#allocation2 + $0x58] sm:$0xff]
    %v55 = vld [vmem:[#allocation2 + $0x60] sm:$0xff]
    %v56 = vld [vmem:[#allocation2 + $0x68] sm:$0xff]
    %v57 = vld [vmem:[#allocation2 + $0x70] sm:$0xff]
    %v58 = vld [vmem:[#allocation2 + $0x78] sm:$0xff]
    %v59 = vld [vmem:[#allocation2 + $0x80] sm:$0xff]
    %v60 = vld [vmem:[#allocation2 + $0x88] sm:$0xff]
    %v61 = vld [vmem:[#allocation2 + $0x90] sm:$0xff]
    %v62 = vld [vmem:[#allocation2 + $0x98] sm:$0xff]
    %v63 = vld [vmem:[#allocation2 + $0xa0] sm:$0xff]
    %v64 = vld [vmem:[#allocation2 + $0xa8] sm:$0xff]
    %v65 = vld [vmem:[#allocation2 + $0xb0] sm:$0xff]
    %v66 = vld [vmem:[#allocation2 + $0xb8] sm:$0xff]
    %v67 = vld [vmem:[#allocation2 + $0xc0] sm:$0xff]
    %v68 = vld [vmem:[#allocation2 + $0xc8] sm:$0xff]
    %v69 = vld [vmem:[#allocation2 + $0xd0] sm:$0xff]
    %v70 = vld [vmem:[#allocation2 + $0xd8] sm:$0xff]
    %v71 = vld [vmem:[#allocation2 + $0xe0] sm:$0xff]
    %v72 = vld [vmem:[#allocation2 + $0xe8] sm:$0xff]
    %v73 = vld [vmem:[#allocation2 + $0xf0] sm:$0xff]
    %v74 = vld [vmem:[#allocation2 + $0xf8] sm:$0xff]
    %v75 = vld [vmem:[%s2] sm:$0x1]
    %v76 = vld [vmem:[%s2 + $0x1] sm:$0x1]
    %v77 = vld [vmem:[%s2 + $0x2] sm:$0x1]
    %v78 = vld [vmem:[#allocation5] sm:$0xff]
    %v79 = vld [vmem:[#allocation5 + $0x8] sm:$0xff]
    %v80 = vld [vmem:[#allocation5 + $0x10] sm:$0xff]
    %v81 = vld [vmem:[#allocation5 + $0x18] sm:$0xff]
    %v82 = vld [vmem:[#allocation5 + $0x20] sm:$0xff]
    %v83 = vld [vmem:[#allocation5 + $0x28] sm:$0xff]
    %v84 = vld [vmem:[#allocation5 + $0x30] sm:$0xff]
    %v85 = vld [vmem:[#allocation5 + $0x38] sm:$0xff]
    %v86 = vld [vmem:[#allocation5 + $0x40] sm:$0xff]
    %v87 = vld [vmem:[#allocation5 + $0x48] sm:$0xff]
    %v88 = vld [vmem:[#allocation5 + $0x50] sm:$0xff]
    %v89 = vld [vmem:[#allocation5 + $0x58] sm:$0xff]
    %v90 = vld [vmem:[#allocation5 + $0x60] sm:$0xff]
    %v91 = vld [vmem:[#allocation5 + $0x68] sm:$0xff]
    %v92 = vld [vmem:[#allocation5 + $0x70] sm:$0xff]
    %v93 = vld [vmem:[#allocation5 + $0x78] sm:$0xff]
    %v94 = vlaneseq
    %v95 = vshrl.u32 %v94, 7
    %v96 = vsub.s32 0, %v95
    %v97 = vrot.slane %v75, %v96
    %98 = vmatprep.subr.mxu0 0.0
    %99 = vmatpush1.msra.mxu0 %v78
    %100 = vmatprep.subr.mxu0 0.0
    %101 = vmatpush1.msra.mxu0 %v79
    %102 = vmatprep.subr.mxu0 0.0
    %103 = vmatpush1.msra.mxu0 %v80
    %104 = vmatprep.subr.mxu0 0.0
    %105 = vmatpush1.msra.mxu0 %v81
    %106 = vmatprep.subr.mxu0 0.0
    %107 = vmatpush1.msra.mxu0 %v82
    %108 = vmatprep.subr.mxu0 0.0
    %109 = vmatpush1.msra.mxu0 %v83
    %110 = vmatprep.subr.mxu0 0.0
    %111 = vmatpush1.msra.mxu0 %v84
    %112 = vmatprep.subr.mxu0 0.0
    %113 = vmatpush1.msra.mxu0 %v85
    %114 = vmatprep.subr.mxu0 0.0
    %115 = vmatpush1.msra.mxu0 %v86
    %116 = vmatprep.subr.mxu0 0.0
    %117 = vmatpush1.msra.mxu0 %v87
    %118 = vmatprep.subr.mxu0 0.0
    %119 = vmatpush1.msra.mxu0 %v88
    %120 = vmatprep.subr.mxu0 0.0
    %121 = vmatpush1.msra.mxu0 %v89
    %122 = vmatprep.subr.mxu0 0.0
    %123 = vmatpush1.msra.mxu0 %v90
    %124 = vmatprep.subr.mxu0 0.0
    %125 = vmatpush1.msra.mxu0 %v91
    %126 = vmatprep.subr.mxu0 0.0
    %127 = vmatpush1.msra.mxu0 %v92
    %128 = vmatprep.subr.mxu0 0.0
    %129 = vmatpush1.msra.mxu0 %v93
    %130 = vmatprep.subr.mxu0 0.0
    %131 = vmatpush1.msra.mxu0 0.0
    %132 = vmatprep.subr.mxu0 0.0
    %133 = vmatpush1.msra.mxu0 0.0
    %134 = vmatprep.subr.mxu0 0.0
    %135 = vmatpush1.msra.mxu0 0.0
    %136 = vmatprep.subr.mxu0 0.0
    %137 = vmatpush1.msra.mxu0 0.0
    %138 = vmatprep.subr.mxu0 0.0
    %139 = vmatpush1.msra.mxu0 0.0
    %140 = vmatprep.subr.mxu0 0.0
    %141 = vmatpush1.msra.mxu0 0.0
    %142 = vmatprep.subr.mxu0 0.0
    %143 = vmatpush1.msra.mxu0 0.0
    %144 = vmatprep.subr.mxu0 0.0
    %145 = vmatpush1.msra.mxu0 0.0
    %146 = vmatprep.subr.mxu0 0.0
    %147 = vmatpush1.msra.mxu0 0.0
    %148 = vmatprep.subr.mxu0 0.0
    %149 = vmatpush1.msra.mxu0 0.0
    %150 = vmatprep.subr.mxu0 0.0
    %151 = vmatpush1.msra.mxu0 0.0
    %152 = vmatprep.subr.mxu0 0.0
    %153 = vmatpush1.msra.mxu0 0.0
    %154 = vmatprep.subr.mxu0 0.0
    %155 = vmatpush1.msra.mxu0 0.0
    %156 = vmatprep.subr.mxu0 0.0
    %157 = vmatpush1.msra.mxu0 0.0
    %158 = vmatprep.subr.mxu0 0.0
    %159 = vmatpush1.msra.mxu0 0.0
    %160 = vmatprep.subr.mxu0 0.0
    %161 = vmatpush1.msra.mxu0 0.0
    %162 = vmatprep.mubr.f32.mxu0 0.0
    %163 = vmatmul.mubr.f32.gmra.mrb[0].mxu0 %v43
    %v164 = vpop.f32.mrb[0].mxu0
    %v165 = vadd.f32 %v97, %v164
    %v166 = vpop.f32.mrb[0].mxu0
    %167 = vmatprep.mubr.f32.mxu0 0.0
    %168 = vmatmul.mubr.f32.gmra.mrb[0].mxu0 %v44
    %v169 = vpop.f32.mrb[0].mxu0
    %v170 = vadd.f32 %v97, %v169
    %v171 = vpop.f32.mrb[0].mxu0
    %172 = vmatprep.mubr.f32.mxu0 0.0
    %173 = vmatmul.mubr.f32.gmra.mrb[0].mxu0 %v45
    %v174 = vpop.f32.mrb[0].mxu0
    %v175 = vadd.f32 %v97, %v174
    %v176 = vpop.f32.mrb[0].mxu0
    %177 = vmatprep.mubr.f32.mxu0 0.0
    %178 = vmatmul.mubr.f32.gmra.mrb[0].mxu0 %v46
    %v179 = vpop.f32.mrb[0].mxu0
    %v180 = vadd.f32 %v97, %v179
    %v181 = vpop.f32.mrb[0].mxu0
    %182 = vmatprep.mubr.f32.mxu0 0.0
    %183 = vmatmul.mubr.f32.gmra.mrb[0].mxu0 %v47
    %v184 = vpop.f32.mrb[0].mxu0
    %v185 = vadd.f32 %v97, %v184
    %v186 = vpop.f32.mrb[0].mxu0
    %187 = vmatprep.mubr.f32.mxu0 0.0
    %188 = vmatmul.mubr.f32.gmra.mrb[0].mxu0 %v48
    %v189 = vpop.f32.mrb[0].mxu0
    %v190 = vadd.f32 %v97, %v189
    %v191 = vpop.f32.mrb[0].mxu0
    %192 = vmatprep.mubr.f32.mxu0 0.0
    %193 = vmatmul.mubr.f32.gmra.mrb[0].mxu0 %v49
    %v194 = vpop.f32.mrb[0].mxu0
    %v195 = vadd.f32 %v97, %v194
    %v196 = vpop.f32.mrb[0].mxu0
    %197 = vmatprep.mubr.f32.mxu0 0.0
    %198 = vmatmul.mubr.f32.gmra.mrb[0].mxu0 %v50
    %v199 = vpop.f32.mrb[0].mxu0
    %v200 = vadd.f32 %v97, %v199
    %v201 = vpop.f32.mrb[0].mxu0
    %202 = vmatprep.mubr.f32.mxu0 0.0
    %203 = vmatmul.mubr.f32.gmra.mrb[0].mxu0 %v51
    %v204 = vpop.f32.mrb[0].mxu0
    %v205 = vadd.f32 %v97, %v204
    %v206 = vpop.f32.mrb[0].mxu0
    %207 = vmatprep.mubr.f32.mxu0 0.0
    %208 = vmatmul.mubr.f32.gmra.mrb[0].mxu0 %v52
    %v209 = vpop.f32.mrb[0].mxu0
    %v210 = vadd.f32 %v97, %v209
    %v211 = vpop.f32.mrb[0].mxu0
    %212 = vmatprep.mubr.f32.mxu0 0.0
    %213 = vmatmul.mubr.f32.gmra.mrb[0].mxu0 %v53
    %v214 = vpop.f32.mrb[0].mxu0
    %v215 = vadd.f32 %v97, %v214
    %v216 = vpop.f32.mrb[0].mxu0
    %217 = vmatprep.mubr.f32.mxu0 0.0
    %218 = vmatmul.mubr.f32.gmra.mrb[0].mxu0 %v54
    %v219 = vpop.f32.mrb[0].mxu0
    %v220 = vadd.f32 %v97, %v219
    %v221 = vpop.f32.mrb[0].mxu0
    %222 = vmatprep.mubr.f32.mxu0 0.0
    %223 = vmatmul.mubr.f32.gmra.mrb[0].mxu0 %v55
    %v224 = vpop.f32.mrb[0].mxu0
    %v225 = vadd.f32 %v97, %v224
    %v226 = vpop.f32.mrb[0].mxu0
    %227 = vmatprep.mubr.f32.mxu0 0.0
    %228 = vmatmul.mubr.f32.gmra.mrb[0].mxu0 %v56
    %v229 = vpop.f32.mrb[0].mxu0
    %v230 = vadd.f32 %v97, %v229
    %v231 = vpop.f32.mrb[0].mxu0
    %232 = vmatprep.mubr.f32.mxu0 0.0
    %233 = vmatmul.mubr.f32.gmra.mrb[0].mxu0 %v57
    %v234 = vpop.f32.mrb[0].mxu0
    %v235 = vadd.f32 %v97, %v234
    %v236 = vpop.f32.mrb[0].mxu0
    %237 = vmatprep.mubr.f32.mxu0 0.0
    %238 = vmatmul.mubr.f32.gmra.mrb[0].mxu0 %v58
    %v239 = vpop.f32.mrb[0].mxu0
    %v240 = vadd.f32 %v97, %v239
    %v241 = vpop.f32.mrb[0].mxu0
    %242 = vmatprep.mubr.f32.mxu0 0.0
    %243 = vmatmul.mubr.f32.gmra.mrb[0].mxu0 %v59
    %v244 = vpop.f32.mrb[0].mxu0
    %v245 = vadd.f32 %v97, %v244
    %v246 = vpop.f32.mrb[0].mxu0
    %247 = vmatprep.mubr.f32.mxu0 0.0
    %248 = vmatmul.mubr.f32.gmra.mrb[0].mxu0 %v60
    %v249 = vpop.f32.mrb[0].mxu0
    %v250 = vadd.f32 %v97, %v249
    %v251 = vpop.f32.mrb[0].mxu0
    %252 = vmatprep.mubr.f32.mxu0 0.0
    %253 = vmatmul.mubr.f32.gmra.mrb[0].mxu0 %v61
    %v254 = vpop.f32.mrb[0].mxu0
    %v255 = vadd.f32 %v97, %v254
    %v256 = vpop.f32.mrb[0].mxu0
    %257 = vmatprep.mubr.f32.mxu0 0.0
    %258 = vmatmul.mubr.f32.gmra.mrb[0].mxu0 %v62
    %v259 = vpop.f32.mrb[0].mxu0
    %v260 = vadd.f32 %v97, %v259
    %v261 = vpop.f32.mrb[0].mxu0
    %262 = vmatprep.mubr.f32.mxu0 0.0
    %263 = vmatmul.mubr.f32.gmra.mrb[0].mxu0 %v63
    %v264 = vpop.f32.mrb[0].mxu0
    %v265 = vadd.f32 %v97, %v264
    %v266 = vpop.f32.mrb[0].mxu0
    %267 = vmatprep.mubr.f32.mxu0 0.0
    %268 = vmatmul.mubr.f32.gmra.mrb[0].mxu0 %v64
    %v269 = vpop.f32.mrb[0].mxu0
    %v270 = vadd.f32 %v97, %v269
    %v271 = vpop.f32.mrb[0].mxu0
    %272 = vmatprep.mubr.f32.mxu0 0.0
    %273 = vmatmul.mubr.f32.gmra.mrb[0].mxu0 %v65
    %v274 = vpop.f32.mrb[0].mxu0
    %v275 = vadd.f32 %v97, %v274
    %v276 = vpop.f32.mrb[0].mxu0
    %277 = vmatprep.mubr.f32.mxu0 0.0
    %278 = vmatmul.mubr.f32.gmra.mrb[0].mxu0 %v66
    %v279 = vpop.f32.mrb[0].mxu0
    %v280 = vadd.f32 %v97, %v279
    %v281 = vpop.f32.mrb[0].mxu0
    %282 = vmatprep.mubr.f32.mxu0 0.0
    %283 = vmatmul.mubr.f32.gmra.mrb[0].mxu0 %v67
    %v284 = vpop.f32.mrb[0].mxu0
    %v285 = vadd.f32 %v97, %v284
    %v286 = vpop.f32.mrb[0].mxu0
    %287 = vmatprep.mubr.f32.mxu0 0.0
    %288 = vmatmul.mubr.f32.gmra.mrb[0].mxu0 %v68
    %v289 = vpop.f32.mrb[0].mxu0
    %v290 = vadd.f32 %v97, %v289
    %v291 = vpop.f32.mrb[0].mxu0
    %292 = vmatprep.mubr.f32.mxu0 0.0
    %293 = vmatmul.mubr.f32.gmra.mrb[0].mxu0 %v69
    %v294 = vpop.f32.mrb[0].mxu0
    %v295 = vadd.f32 %v97, %v294
    %v296 = vpop.f32.mrb[0].mxu0
    %297 = vmatprep.mubr.f32.mxu0 0.0
    %298 = vmatmul.mubr.f32.gmra.mrb[0].mxu0 %v70
    %v299 = vpop.f32.mrb[0].mxu0
    %v300 = vadd.f32 %v97, %v299
    %v301 = vpop.f32.mrb[0].mxu0
    %302 = vmatprep.mubr.f32.mxu0 0.0
    %303 = vmatmul.mubr.f32.gmra.mrb[0].mxu0 %v71
    %v304 = vpop.f32.mrb[0].mxu0
    %v305 = vadd.f32 %v97, %v304
    %v306 = vpop.f32.mrb[0].mxu0
    %307 = vmatprep.mubr.f32.mxu0 0.0
    %308 = vmatmul.mubr.f32.gmra.mrb[0].mxu0 %v72
    %v309 = vpop.f32.mrb[0].mxu0
    %v310 = vadd.f32 %v97, %v309
    %v311 = vpop.f32.mrb[0].mxu0
    %312 = vmatprep.mubr.f32.mxu0 0.0
    %313 = vmatmul.mubr.f32.gmra.mrb[0].mxu0 %v73
    %v314 = vpop.f32.mrb[0].mxu0
    %v315 = vadd.f32 %v97, %v314
    %v316 = vpop.f32.mrb[0].mxu0
    %317 = vmatprep.mubr.f32.mxu0 0.0
    %318 = vmatmul.mubr.f32.gmra.mrb[0].mxu0 %v74
    %v319 = vpop.f32.mrb[0].mxu0
    %v320 = vadd.f32 %v97, %v319
    %v321 = vpop.f32.mrb[0].mxu0
    %322 = vdwg.mxu0
    %vm323 = vcmp.ge.f32.partialorder %v165, 0.0
    %vm324 = vcmp.ge.f32.partialorder %v170, 0.0
    %vm325 = vcmp.ge.f32.partialorder %v175, 0.0
    %vm326 = vcmp.ge.f32.partialorder %v180, 0.0
    %vm327 = vcmp.ge.f32.partialorder %v185, 0.0
    %vm328 = vcmp.ge.f32.partialorder %v190, 0.0
    %vm329 = vcmp.ge.f32.partialorder %v195, 0.0
    %vm330 = vcmp.ge.f32.partialorder %v200, 0.0
    %vm331 = vcmp.ge.f32.partialorder %v205, 0.0
    %vm332 = vcmp.ge.f32.partialorder %v210, 0.0
    %vm333 = vcmp.ge.f32.partialorder %v215, 0.0
    %vm334 = vcmp.ge.f32.partialorder %v220, 0.0
    %vm335 = vcmp.ge.f32.partialorder %v225, 0.0
    %vm336 = vcmp.ge.f32.partialorder %v230, 0.0
    %vm337 = vcmp.ge.f32.partialorder %v235, 0.0
    %vm338 = vcmp.ge.f32.partialorder %v240, 0.0
    %vm339 = vcmp.ge.f32.partialorder %v245, 0.0
    %vm340 = vcmp.ge.f32.partialorder %v250, 0.0
    %vm341 = vcmp.ge.f32.partialorder %v255, 0.0
    %vm342 = vcmp.ge.f32.partialorder %v260, 0.0
    %vm343 = vcmp.ge.f32.partialorder %v265, 0.0
    %vm344 = vcmp.ge.f32.partialorder %v270, 0.0
    %vm345 = vcmp.ge.f32.partialorder %v275, 0.0
    %vm346 = vcmp.ge.f32.partialorder %v280, 0.0
    %vm347 = vcmp.ge.f32.partialorder %v285, 0.0
    %vm348 = vcmp.ge.f32.partialorder %v290, 0.0
    %vm349 = vcmp.ge.f32.partialorder %v295, 0.0
    %vm350 = vcmp.ge.f32.partialorder %v300, 0.0
    %vm351 = vcmp.ge.f32.partialorder %v305, 0.0
    %vm352 = vcmp.ge.f32.partialorder %v310, 0.0
    %vm353 = vcmp.ge.f32.partialorder %v315, 0.0
    %vm354 = vcmp.ge.f32.partialorder %v320, 0.0
    %v355 = vmul.f32 %v165, 0.2
    %v356 = vmul.f32 %v170, 0.2
    %v357 = vmul.f32 %v175, 0.2
    %v358 = vmul.f32 %v180, 0.2
    %v359 = vmul.f32 %v185, 0.2
    %v360 = vmul.f32 %v190, 0.2
    %v361 = vmul.f32 %v195, 0.2
    %v362 = vmul.f32 %v200, 0.2
    %v363 = vmul.f32 %v205, 0.2
    %v364 = vmul.f32 %v210, 0.2
    %v365 = vmul.f32 %v215, 0.2
    %v366 = vmul.f32 %v220, 0.2
    %v367 = vmul.f32 %v225, 0.2
    %v368 = vmul.f32 %v230, 0.2
    %v369 = vmul.f32 %v235, 0.2
    %v370 = vmul.f32 %v240, 0.2
    %v371 = vmul.f32 %v245, 0.2
    %v372 = vmul.f32 %v250, 0.2
    %v373 = vmul.f32 %v255, 0.2
    %v374 = vmul.f32 %v260, 0.2
    %v375 = vmul.f32 %v265, 0.2
    %v376 = vmul.f32 %v270, 0.2
    %v377 = vmul.f32 %v275, 0.2
    %v378 = vmul.f32 %v280, 0.2
    %v379 = vmul.f32 %v285, 0.2
    %v380 = vmul.f32 %v290, 0.2
    %v381 = vmul.f32 %v295, 0.2
    %v382 = vmul.f32 %v300, 0.2
    %v383 = vmul.f32 %v305, 0.2
    %v384 = vmul.f32 %v310, 0.2
    %v385 = vmul.f32 %v315, 0.2
    %v386 = vmul.f32 %v320, 0.2
    %v387 = vsel %vm323, %v165, %v355
    %v388 = vsel %vm324, %v170, %v356
    %v389 = vsel %vm325, %v175, %v357
    %v390 = vsel %vm326, %v180, %v358
    %v391 = vsel %vm327, %v185, %v359
    %v392 = vsel %vm328, %v190, %v360
    %v393 = vsel %vm329, %v195, %v361
    %v394 = vsel %vm330, %v200, %v362
    %v395 = vsel %vm331, %v205, %v363
    %v396 = vsel %vm332, %v210, %v364
    %v397 = vsel %vm333, %v215, %v365
    %v398 = vsel %vm334, %v220, %v366
    %v399 = vsel %vm335, %v225, %v367
    %v400 = vsel %vm336, %v230, %v368
    %v401 = vsel %vm337, %v235, %v369
    %v402 = vsel %vm338, %v240, %v370
    %v403 = vsel %vm339, %v245, %v371
    %v404 = vsel %vm340, %v250, %v372
    %v405 = vsel %vm341, %v255, %v373
    %v406 = vsel %vm342, %v260, %v374
    %v407 = vsel %vm343, %v265, %v375
    %v408 = vsel %vm344, %v270, %v376
    %v409 = vsel %vm345, %v275, %v377
    %v410 = vsel %vm346, %v280, %v378
    %v411 = vsel %vm347, %v285, %v379
    %v412 = vsel %vm348, %v290, %v380
    %v413 = vsel %vm349, %v295, %v381
    %v414 = vsel %vm350, %v300, %v382
    %v415 = vsel %vm351, %v305, %v383
    %v416 = vsel %vm352, %v310, %v384
    %v417 = vsel %vm353, %v315, %v385
    %v418 = vsel %vm354, %v320, %v386
    %419 = vadd.xlane.f32.xlu0 %v387
    %v420 = vpop.xlane.xlu0 %419
    %421 = vadd.xlane.f32.xlu0 %v388
    %v422 = vpop.xlane.xlu0 %421
    %423 = vadd.xlane.f32.xlu0 %v389
    %v424 = vpop.xlane.xlu0 %423
    %425 = vadd.xlane.f32.xlu0 %v390
    %v426 = vpop.xlane.xlu0 %425
    %427 = vadd.xlane.f32.xlu0 %v391
    %v428 = vpop.xlane.xlu0 %427
    %429 = vadd.xlane.f32.xlu0 %v392
    %v430 = vpop.xlane.xlu0 %429
    %431 = vadd.xlane.f32.xlu0 %v393
    %v432 = vpop.xlane.xlu0 %431
    %433 = vadd.xlane.f32.xlu0 %v394
    %v434 = vpop.xlane.xlu0 %433
    %435 = vadd.xlane.f32.xlu0 %v395
    %v436 = vpop.xlane.xlu0 %435
    %437 = vadd.xlane.f32.xlu0 %v396
    %v438 = vpop.xlane.xlu0 %437
    %439 = vadd.xlane.f32.xlu0 %v397
    %v440 = vpop.xlane.xlu0 %439
    %441 = vadd.xlane.f32.xlu0 %v398
    %v442 = vpop.xlane.xlu0 %441
    %443 = vadd.xlane.f32.xlu0 %v399
    %v444 = vpop.xlane.xlu0 %443
    %445 = vadd.xlane.f32.xlu0 %v400
    %v446 = vpop.xlane.xlu0 %445
    %447 = vadd.xlane.f32.xlu0 %v401
    %v448 = vpop.xlane.xlu0 %447
    %449 = vadd.xlane.f32.xlu0 %v402
    %v450 = vpop.xlane.xlu0 %449
    %451 = vadd.xlane.f32.xlu0 %v403
    %v452 = vpop.xlane.xlu0 %451
    %453 = vadd.xlane.f32.xlu0 %v404
    %v454 = vpop.xlane.xlu0 %453
    %455 = vadd.xlane.f32.xlu0 %v405
    %v456 = vpop.xlane.xlu0 %455
    %457 = vadd.xlane.f32.xlu0 %v406
    %v458 = vpop.xlane.xlu0 %457
    %459 = vadd.xlane.f32.xlu0 %v407
    %v460 = vpop.xlane.xlu0 %459
    %461 = vadd.xlane.f32.xlu0 %v408
    %v462 = vpop.xlane.xlu0 %461
    %463 = vadd.xlane.f32.xlu0 %v409
    %v464 = vpop.xlane.xlu0 %463
    %465 = vadd.xlane.f32.xlu0 %v410
    %v466 = vpop.xlane.xlu0 %465
    %467 = vadd.xlane.f32.xlu0 %v411
    %v468 = vpop.xlane.xlu0 %467
    %469 = vadd.xlane.f32.xlu0 %v412
    %v470 = vpop.xlane.xlu0 %469
    %471 = vadd.xlane.f32.xlu0 %v413
    %v472 = vpop.xlane.xlu0 %471
    %473 = vadd.xlane.f32.xlu0 %v414
    %v474 = vpop.xlane.xlu0 %473
    %475 = vadd.xlane.f32.xlu0 %v415
    %v476 = vpop.xlane.xlu0 %475
    %477 = vadd.xlane.f32.xlu0 %v416
    %v478 = vpop.xlane.xlu0 %477
    %479 = vadd.xlane.f32.xlu0 %v417
    %v480 = vpop.xlane.xlu0 %479
    %481 = vadd.xlane.f32.xlu0 %v418
    %v482 = vpop.xlane.xlu0 %481
    %v483 = vmul.f32 %v387, %v387
    %v484 = vmul.f32 %v388, %v388
    %v485 = vmul.f32 %v389, %v389
    %v486 = vmul.f32 %v390, %v390
    %v487 = vmul.f32 %v391, %v391
    %v488 = vmul.f32 %v392, %v392
    %v489 = vmul.f32 %v393, %v393
    %v490 = vmul.f32 %v394, %v394
    %v491 = vmul.f32 %v395, %v395
    %v492 = vmul.f32 %v396, %v396
    %v493 = vmul.f32 %v397, %v397
    %v494 = vmul.f32 %v398, %v398
    %v495 = vmul.f32 %v399, %v399
    %v496 = vmul.f32 %v400, %v400
    %v497 = vmul.f32 %v401, %v401
    %v498 = vmul.f32 %v402, %v402
    %v499 = vmul.f32 %v403, %v403
    %v500 = vmul.f32 %v404, %v404
    %v501 = vmul.f32 %v405, %v405
    %v502 = vmul.f32 %v406, %v406
    %v503 = vmul.f32 %v407, %v407
    %v504 = vmul.f32 %v408, %v408
    %v505 = vmul.f32 %v409, %v409
    %v506 = vmul.f32 %v410, %v410
    %v507 = vmul.f32 %v411, %v411
    %v508 = vmul.f32 %v412, %v412
    %v509 = vmul.f32 %v413, %v413
    %v510 = vmul.f32 %v414, %v414
    %v511 = vmul.f32 %v415, %v415
    %v512 = vmul.f32 %v416, %v416
    %v513 = vmul.f32 %v417, %v417
    %v514 = vmul.f32 %v418, %v418
    %515 = vadd.xlane.f32.xlu0 %v483
    %v516 = vpop.xlane.xlu0 %515
    %517 = vadd.xlane.f32.xlu0 %v484
    %v518 = vpop.xlane.xlu0 %517
    %519 = vadd.xlane.f32.xlu0 %v485
    %v520 = vpop.xlane.xlu0 %519
    %521 = vadd.xlane.f32.xlu0 %v486
    %v522 = vpop.xlane.xlu0 %521
    %523 = vadd.xlane.f32.xlu0 %v487
    %v524 = vpop.xlane.xlu0 %523
    %525 = vadd.xlane.f32.xlu0 %v488
    %v526 = vpop.xlane.xlu0 %525
    %527 = vadd.xlane.f32.xlu0 %v489
    %v528 = vpop.xlane.xlu0 %527
    %529 = vadd.xlane.f32.xlu0 %v490
    %v530 = vpop.xlane.xlu0 %529
    %531 = vadd.xlane.f32.xlu0 %v491
    %v532 = vpop.xlane.xlu0 %531
    %533 = vadd.xlane.f32.xlu0 %v492
    %v534 = vpop.xlane.xlu0 %533
    %535 = vadd.xlane.f32.xlu0 %v493
    %v536 = vpop.xlane.xlu0 %535
    %537 = vadd.xlane.f32.xlu0 %v494
    %v538 = vpop.xlane.xlu0 %537
    %539 = vadd.xlane.f32.xlu0 %v495
    %v540 = vpop.xlane.xlu0 %539
    %541 = vadd.xlane.f32.xlu0 %v496
    %v542 = vpop.xlane.xlu0 %541
    %543 = vadd.xlane.f32.xlu0 %v497
    %v544 = vpop.xlane.xlu0 %543
    %545 = vadd.xlane.f32.xlu0 %v498
    %v546 = vpop.xlane.xlu0 %545
    %547 = vadd.xlane.f32.xlu0 %v499
    %v548 = vpop.xlane.xlu0 %547
    %549 = vadd.xlane.f32.xlu0 %v500
    %v550 = vpop.xlane.xlu0 %549
    %551 = vadd.xlane.f32.xlu0 %v501
    %v552 = vpop.xlane.xlu0 %551
    %553 = vadd.xlane.f32.xlu0 %v502
    %v554 = vpop.xlane.xlu0 %553
    %555 = vadd.xlane.f32.xlu0 %v503
    %v556 = vpop.xlane.xlu0 %555
    %557 = vadd.xlane.f32.xlu0 %v504
    %v558 = vpop.xlane.xlu0 %557
    %559 = vadd.xlane.f32.xlu0 %v505
    %v560 = vpop.xlane.xlu0 %559
    %561 = vadd.xlane.f32.xlu0 %v506
    %v562 = vpop.xlane.xlu0 %561
    %563 = vadd.xlane.f32.xlu0 %v507
    %v564 = vpop.xlane.xlu0 %563
    %565 = vadd.xlane.f32.xlu0 %v508
    %v566 = vpop.xlane.xlu0 %565
    %567 = vadd.xlane.f32.xlu0 %v509
    %v568 = vpop.xlane.xlu0 %567
    %569 = vadd.xlane.f32.xlu0 %v510
    %v570 = vpop.xlane.xlu0 %569
    %571 = vadd.xlane.f32.xlu0 %v511
    %v572 = vpop.xlane.xlu0 %571
    %573 = vadd.xlane.f32.xlu0 %v512
    %v574 = vpop.xlane.xlu0 %573
    %575 = vadd.xlane.f32.xlu0 %v513
    %v576 = vpop.xlane.xlu0 %575
    %577 = vadd.xlane.f32.xlu0 %v514
    %v578 = vpop.xlane.xlu0 %577
    %v579 = vmul.f32 %v420, 0.0078125
    %v580 = vmul.f32 %v422, 0.0078125
    %v581 = vmul.f32 %v424, 0.0078125
    %v582 = vmul.f32 %v426, 0.0078125
    %v583 = vmul.f32 %v428, 0.0078125
    %v584 = vmul.f32 %v430, 0.0078125
    %v585 = vmul.f32 %v432, 0.0078125
    %v586 = vmul.f32 %v434, 0.0078125
    %v587 = vmul.f32 %v436, 0.0078125
    %v588 = vmul.f32 %v438, 0.0078125
    %v589 = vmul.f32 %v440, 0.0078125
    %v590 = vmul.f32 %v442, 0.0078125
    %v591 = vmul.f32 %v444, 0.0078125
    %v592 = vmul.f32 %v446, 0.0078125
    %v593 = vmul.f32 %v448, 0.0078125
    %v594 = vmul.f32 %v450, 0.0078125
    %v595 = vmul.f32 %v452, 0.0078125
    %v596 = vmul.f32 %v454, 0.0078125
    %v597 = vmul.f32 %v456, 0.0078125
    %v598 = vmul.f32 %v458, 0.0078125
    %v599 = vmul.f32 %v460, 0.0078125
    %v600 = vmul.f32 %v462, 0.0078125
    %v601 = vmul.f32 %v464, 0.0078125
    %v602 = vmul.f32 %v466, 0.0078125
    %v603 = vmul.f32 %v468, 0.0078125
    %v604 = vmul.f32 %v470, 0.0078125
    %v605 = vmul.f32 %v472, 0.0078125
    %v606 = vmul.f32 %v474, 0.0078125
    %v607 = vmul.f32 %v476, 0.0078125
    %v608 = vmul.f32 %v478, 0.0078125
    %v609 = vmul.f32 %v480, 0.0078125
    %v610 = vmul.f32 %v482, 0.0078125
    %v611 = vmul.f32 %v516, 0.0078125
    %v612 = vmul.f32 %v518, 0.0078125
    %v613 = vmul.f32 %v520, 0.0078125
    %v614 = vmul.f32 %v522, 0.0078125
    %v615 = vmul.f32 %v524, 0.0078125
    %v616 = vmul.f32 %v526, 0.0078125
    %v617 = vmul.f32 %v528, 0.0078125
    %v618 = vmul.f32 %v530, 0.0078125
    %v619 = vmul.f32 %v532, 0.0078125
    %v620 = vmul.f32 %v534, 0.0078125
    %v621 = vmul.f32 %v536, 0.0078125
    %v622 = vmul.f32 %v538, 0.0078125
    %v623 = vmul.f32 %v540, 0.0078125
    %v624 = vmul.f32 %v542, 0.0078125
    %v625 = vmul.f32 %v544, 0.0078125
    %v626 = vmul.f32 %v546, 0.0078125
    %v627 = vmul.f32 %v548, 0.0078125
    %v628 = vmul.f32 %v550, 0.0078125
    %v629 = vmul.f32 %v552, 0.0078125
    %v630 = vmul.f32 %v554, 0.0078125
    %v631 = vmul.f32 %v556, 0.0078125
    %v632 = vmul.f32 %v558, 0.0078125
    %v633 = vmul.f32 %v560, 0.0078125
    %v634 = vmul.f32 %v562, 0.0078125
    %v635 = vmul.f32 %v564, 0.0078125
    %v636 = vmul.f32 %v566, 0.0078125
    %v637 = vmul.f32 %v568, 0.0078125
    %v638 = vmul.f32 %v570, 0.0078125
    %v639 = vmul.f32 %v572, 0.0078125
    %v640 = vmul.f32 %v574, 0.0078125
    %v641 = vmul.f32 %v576, 0.0078125
    %v642 = vmul.f32 %v578, 0.0078125
    %v643 = vmul.f32 %v579, %v579
    %v644 = vmul.f32 %v580, %v580
    %v645 = vmul.f32 %v581, %v581
    %v646 = vmul.f32 %v582, %v582
    %v647 = vmul.f32 %v583, %v583
    %v648 = vmul.f32 %v584, %v584
    %v649 = vmul.f32 %v585, %v585
    %v650 = vmul.f32 %v586, %v586
    %v651 = vmul.f32 %v587, %v587
    %v652 = vmul.f32 %v588, %v588
    %v653 = vmul.f32 %v589, %v589
    %v654 = vmul.f32 %v590, %v590
    %v655 = vmul.f32 %v591, %v591
    %v656 = vmul.f32 %v592, %v592
    %v657 = vmul.f32 %v593, %v593
    %v658 = vmul.f32 %v594, %v594
    %v659 = vmul.f32 %v595, %v595
    %v660 = vmul.f32 %v596, %v596
    %v661 = vmul.f32 %v597, %v597
    %v662 = vmul.f32 %v598, %v598
    %v663 = vmul.f32 %v599, %v599
    %v664 = vmul.f32 %v600, %v600
    %v665 = vmul.f32 %v601, %v601
    %v666 = vmul.f32 %v602, %v602
    %v667 = vmul.f32 %v603, %v603
    %v668 = vmul.f32 %v604, %v604
    %v669 = vmul.f32 %v605, %v605
    %v670 = vmul.f32 %v606, %v606
    %v671 = vmul.f32 %v607, %v607
    %v672 = vmul.f32 %v608, %v608
    %v673 = vmul.f32 %v609, %v609
    %v674 = vmul.f32 %v610, %v610
    %v675 = vsub.f32 %v611, %v643
    %v676 = vsub.f32 %v612, %v644
    %v677 = vsub.f32 %v613, %v645
    %v678 = vsub.f32 %v614, %v646
    %v679 = vsub.f32 %v615, %v647
    %v680 = vsub.f32 %v616, %v648
    %v681 = vsub.f32 %v617, %v649
    %v682 = vsub.f32 %v618, %v650
    %v683 = vsub.f32 %v619, %v651
    %v684 = vsub.f32 %v620, %v652
    %v685 = vsub.f32 %v621, %v653
    %v686 = vsub.f32 %v622, %v654
    %v687 = vsub.f32 %v623, %v655
    %v688 = vsub.f32 %v624, %v656
    %v689 = vsub.f32 %v625, %v657
    %v690 = vsub.f32 %v626, %v658
    %v691 = vsub.f32 %v627, %v659
    %v692 = vsub.f32 %v628, %v660
    %v693 = vsub.f32 %v629, %v661
    %v694 = vsub.f32 %v630, %v662
    %v695 = vsub.f32 %v631, %v663
    %v696 = vsub.f32 %v632, %v664
    %v697 = vsub.f32 %v633, %v665
    %v698 = vsub.f32 %v634, %v666
    %v699 = vsub.f32 %v635, %v667
    %v700 = vsub.f32 %v636, %v668
    %v701 = vsub.f32 %v637, %v669
    %v702 = vsub.f32 %v638, %v670
    %v703 = vsub.f32 %v639, %v671
    %v704 = vsub.f32 %v640, %v672
    %v705 = vsub.f32 %v641, %v673
    %v706 = vsub.f32 %v642, %v674
    %v707 = vsub.f32 %v387, %v579
    %v708 = vsub.f32 %v388, %v580
    %v709 = vsub.f32 %v389, %v581
    %v710 = vsub.f32 %v390, %v582
    %v711 = vsub.f32 %v391, %v583
    %v712 = vsub.f32 %v392, %v584
    %v713 = vsub.f32 %v393, %v585
    %v714 = vsub.f32 %v394, %v586
    %v715 = vsub.f32 %v395, %v587
    %v716 = vsub.f32 %v396, %v588
    %v717 = vsub.f32 %v397, %v589
    %v718 = vsub.f32 %v398, %v590
    %v719 = vsub.f32 %v399, %v591
    %v720 = vsub.f32 %v400, %v592
    %v721 = vsub.f32 %v401, %v593
    %v722 = vsub.f32 %v402, %v594
    %v723 = vsub.f32 %v403, %v595
    %v724 = vsub.f32 %v404, %v596
    %v725 = vsub.f32 %v405, %v597
    %v726 = vsub.f32 %v406, %v598
    %v727 = vsub.f32 %v407, %v599
    %v728 = vsub.f32 %v408, %v600
    %v729 = vsub.f32 %v409, %v601
    %v730 = vsub.f32 %v410, %v602
    %v731 = vsub.f32 %v411, %v603
    %v732 = vsub.f32 %v412, %v604
    %v733 = vsub.f32 %v413, %v605
    %v734 = vsub.f32 %v414, %v606
    %v735 = vsub.f32 %v415, %v607
    %v736 = vsub.f32 %v416, %v608
    %v737 = vsub.f32 %v417, %v609
    %v738 = vsub.f32 %v418, %v610
    %v739 = vadd.f32 %v675, 1e-05
    %v740 = vadd.f32 %v676, 1e-05
    %v741 = vadd.f32 %v677, 1e-05
    %v742 = vadd.f32 %v678, 1e-05
    %v743 = vadd.f32 %v679, 1e-05
    %v744 = vadd.f32 %v680, 1e-05
    %v745 = vadd.f32 %v681, 1e-05
    %v746 = vadd.f32 %v682, 1e-05
    %v747 = vadd.f32 %v683, 1e-05
    %v748 = vadd.f32 %v684, 1e-05
    %v749 = vadd.f32 %v685, 1e-05
    %v750 = vadd.f32 %v686, 1e-05
    %v751 = vadd.f32 %v687, 1e-05
    %v752 = vadd.f32 %v688, 1e-05
    %v753 = vadd.f32 %v689, 1e-05
    %v754 = vadd.f32 %v690, 1e-05
    %v755 = vadd.f32 %v691, 1e-05
    %v756 = vadd.f32 %v692, 1e-05
    %v757 = vadd.f32 %v693, 1e-05
    %v758 = vadd.f32 %v694, 1e-05
    %v759 = vadd.f32 %v695, 1e-05
    %v760 = vadd.f32 %v696, 1e-05
    %v761 = vadd.f32 %v697, 1e-05
    %v762 = vadd.f32 %v698, 1e-05
    %v763 = vadd.f32 %v699, 1e-05
    %v764 = vadd.f32 %v700, 1e-05
    %v765 = vadd.f32 %v701, 1e-05
    %v766 = vadd.f32 %v702, 1e-05
    %v767 = vadd.f32 %v703, 1e-05
    %v768 = vadd.f32 %v704, 1e-05
    %v769 = vadd.f32 %v705, 1e-05
    %v770 = vadd.f32 %v706, 1e-05
    %v771 = vrsqrt.pop %v739
    %v772 = vrsqrt.pop %v740
    %v773 = vrsqrt.pop %v741
    %v774 = vrsqrt.pop %v742
    %v775 = vrsqrt.pop %v743
    %v776 = vrsqrt.pop %v744
    %v777 = vrsqrt.pop %v745
    %v778 = vrsqrt.pop %v746
    %v779 = vrsqrt.pop %v747
    %v780 = vrsqrt.pop %v748
    %v781 = vrsqrt.pop %v749
    %v782 = vrsqrt.pop %v750
    %v783 = vrsqrt.pop %v751
    %v784 = vrsqrt.pop %v752
    %v785 = vrsqrt.pop %v753
    %v786 = vrsqrt.pop %v754
    %v787 = vrsqrt.pop %v755
    %v788 = vrsqrt.pop %v756
    %v789 = vrsqrt.pop %v757
    %v790 = vrsqrt.pop %v758
    %v791 = vrsqrt.pop %v759
    %v792 = vrsqrt.pop %v760
    %v793 = vrsqrt.pop %v761
    %v794 = vrsqrt.pop %v762
    %v795 = vrsqrt.pop %v763
    %v796 = vrsqrt.pop %v764
    %v797 = vrsqrt.pop %v765
    %v798 = vrsqrt.pop %v766
    %v799 = vrsqrt.pop %v767
    %v800 = vrsqrt.pop %v768
    %v801 = vrsqrt.pop %v769
    %v802 = vrsqrt.pop %v770
    %v803 = vmul.f32 %v707, %v771
    %v804 = vmul.f32 %v708, %v772
    %v805 = vmul.f32 %v709, %v773
    %v806 = vmul.f32 %v710, %v774
    %v807 = vmul.f32 %v711, %v775
    %v808 = vmul.f32 %v712, %v776
    %v809 = vmul.f32 %v713, %v777
    %v810 = vmul.f32 %v714, %v778
    %v811 = vmul.f32 %v715, %v779
    %v812 = vmul.f32 %v716, %v780
    %v813 = vmul.f32 %v717, %v781
    %v814 = vmul.f32 %v718, %v782
    %v815 = vmul.f32 %v719, %v783
    %v816 = vmul.f32 %v720, %v784
    %v817 = vmul.f32 %v721, %v785
    %v818 = vmul.f32 %v722, %v786
    %v819 = vmul.f32 %v723, %v787
    %v820 = vmul.f32 %v724, %v788
    %v821 = vmul.f32 %v725, %v789
    %v822 = vmul.f32 %v726, %v790
    %v823 = vmul.f32 %v727, %v791
    %v824 = vmul.f32 %v728, %v792
    %v825 = vmul.f32 %v729, %v793
    %v826 = vmul.f32 %v730, %v794
    %v827 = vmul.f32 %v731, %v795
    %v828 = vmul.f32 %v732, %v796
    %v829 = vmul.f32 %v733, %v797
    %v830 = vmul.f32 %v734, %v798
    %v831 = vmul.f32 %v735, %v799
    %v832 = vmul.f32 %v736, %v800
    %v833 = vmul.f32 %v737, %v801
    %v834 = vmul.f32 %v738, %v802
    %v835 = vlaneseq
    %v836 = vshrl.u32 %v835, 7
    %v837 = vsub.s32 0, %v836
    %v838 = vrot.slane %v76, %v837
    %v839 = vmul.f32 %v803, %v838
    %v840 = vmul.f32 %v804, %v838
    %v841 = vmul.f32 %v805, %v838
    %v842 = vmul.f32 %v806, %v838
    %v843 = vmul.f32 %v807, %v838
    %v844 = vmul.f32 %v808, %v838
    %v845 = vmul.f32 %v809, %v838
    %v846 = vmul.f32 %v810, %v838
    %v847 = vmul.f32 %v811, %v838
    %v848 = vmul.f32 %v812, %v838
    %v849 = vmul.f32 %v813, %v838
    %v850 = vmul.f32 %v814, %v838
    %v851 = vmul.f32 %v815, %v838
    %v852 = vmul.f32 %v816, %v838
    %v853 = vmul.f32 %v817, %v838
    %v854 = vmul.f32 %v818, %v838
    %v855 = vmul.f32 %v819, %v838
    %v856 = vmul.f32 %v820, %v838
    %v857 = vmul.f32 %v821, %v838
    %v858 = vmul.f32 %v822, %v838
    %v859 = vmul.f32 %v823, %v838
    %v860 = vmul.f32 %v824, %v838
    %v861 = vmul.f32 %v825, %v838
    %v862 = vmul.f32 %v826, %v838
    %v863 = vmul.f32 %v827, %v838
    %v864 = vmul.f32 %v828, %v838
    %v865 = vmul.f32 %v829, %v838
    %v866 = vmul.f32 %v830, %v838
    %v867 = vmul.f32 %v831, %v838
    %v868 = vmul.f32 %v832, %v838
    %v869 = vmul.f32 %v833, %v838
    %v870 = vmul.f32 %v834, %v838
    %v871 = vlaneseq
    %v872 = vshrl.u32 %v871, 7
    %v873 = vsub.s32 0, %v872
    %v874 = vrot.slane %v77, %v873
    %v875 = vadd.f32 %v839, %v874
    %v876 = vadd.f32 %v840, %v874
    %v877 = vadd.f32 %v841, %v874
    %v878 = vadd.f32 %v842, %v874
    %v879 = vadd.f32 %v843, %v874
    %v880 = vadd.f32 %v844, %v874
    %v881 = vadd.f32 %v845, %v874
    %v882 = vadd.f32 %v846, %v874
    %v883 = vadd.f32 %v847, %v874
    %v884 = vadd.f32 %v848, %v874
    %v885 = vadd.f32 %v849, %v874
    %v886 = vadd.f32 %v850, %v874
    %v887 = vadd.f32 %v851, %v874
    %v888 = vadd.f32 %v852, %v874
    %v889 = vadd.f32 %v853, %v874
    %v890 = vadd.f32 %v854, %v874
    %v891 = vadd.f32 %v855, %v874
    %v892 = vadd.f32 %v856, %v874
    %v893 = vadd.f32 %v857, %v874
    %v894 = vadd.f32 %v858, %v874
    %v895 = vadd.f32 %v859, %v874
    %v896 = vadd.f32 %v860, %v874
    %v897 = vadd.f32 %v861, %v874
    %v898 = vadd.f32 %v862, %v874
    %v899 = vadd.f32 %v863, %v874
    %v900 = vadd.f32 %v864, %v874
    %v901 = vadd.f32 %v865, %v874
    %v902 = vadd.f32 %v866, %v874
    %v903 = vadd.f32 %v867, %v874
    %v904 = vadd.f32 %v868, %v874
    %v905 = vadd.f32 %v869, %v874
    %v906 = vadd.f32 %v870, %v874
    %v907 = vadd.f32 %v43, %v875
    %v908 = vadd.f32 %v44, %v876
    %v909 = vadd.f32 %v45, %v877
    %v910 = vadd.f32 %v46, %v878
    %v911 = vadd.f32 %v47, %v879
    %v912 = vadd.f32 %v48, %v880
    %v913 = vadd.f32 %v49, %v881
    %v914 = vadd.f32 %v50, %v882
    %v915 = vadd.f32 %v51, %v883
    %v916 = vadd.f32 %v52, %v884
    %v917 = vadd.f32 %v53, %v885
    %v918 = vadd.f32 %v54, %v886
    %v919 = vadd.f32 %v55, %v887
    %v920 = vadd.f32 %v56, %v888
    %v921 = vadd.f32 %v57, %v889
    %v922 = vadd.f32 %v58, %v890
    %v923 = vadd.f32 %v59, %v891
    %v924 = vadd.f32 %v60, %v892
    %v925 = vadd.f32 %v61, %v893
    %v926 = vadd.f32 %v62, %v894
    %v927 = vadd.f32 %v63, %v895
    %v928 = vadd.f32 %v64, %v896
    %v929 = vadd.f32 %v65, %v897
    %v930 = vadd.f32 %v66, %v898
    %v931 = vadd.f32 %v67, %v899
    %v932 = vadd.f32 %v68, %v900
    %v933 = vadd.f32 %v69, %v901
    %v934 = vadd.f32 %v70, %v902
    %v935 = vadd.f32 %v71, %v903
    %v936 = vadd.f32 %v72, %v904
    %v937 = vadd.f32 %v73, %v905
    %v938 = vadd.f32 %v74, %v906
    %939 = vst [vmem:[#allocation7] sm:$0xff] %v907
    %940 = vst [vmem:[#allocation7 + $0x8] sm:$0xff] %v908
    %941 = vst [vmem:[#allocation7 + $0x10] sm:$0xff] %v909
    %942 = vst [vmem:[#allocation7 + $0x18] sm:$0xff] %v910
    %943 = vst [vmem:[#allocation7 + $0x20] sm:$0xff] %v911
    %944 = vst [vmem:[#allocation7 + $0x28] sm:$0xff] %v912
    %945 = vst [vmem:[#allocation7 + $0x30] sm:$0xff] %v913
    %946 = vst [vmem:[#allocation7 + $0x38] sm:$0xff] %v914
    %947 = vst [vmem:[#allocation7 + $0x40] sm:$0xff] %v915
    %948 = vst [vmem:[#allocation7 + $0x48] sm:$0xff] %v916
    %949 = vst [vmem:[#allocation7 + $0x50] sm:$0xff] %v917
    %950 = vst [vmem:[#allocation7 + $0x58] sm:$0xff] %v918
    %951 = vst [vmem:[#allocation7 + $0x60] sm:$0xff] %v919
    %952 = vst [vmem:[#allocation7 + $0x68] sm:$0xff] %v920
    %953 = vst [vmem:[#allocation7 + $0x70] sm:$0xff] %v921
    %954 = vst [vmem:[#allocation7 + $0x78] sm:$0xff] %v922
    %955 = vst [vmem:[#allocation7 + $0x80] sm:$0xff] %v923
    %956 = vst [vmem:[#allocation7 + $0x88] sm:$0xff] %v924
    %957 = vst [vmem:[#allocation7 + $0x90] sm:$0xff] %v925
    %958 = vst [vmem:[#allocation7 + $0x98] sm:$0xff] %v926
    %959 = vst [vmem:[#allocation7 + $0xa0] sm:$0xff] %v927
    %960 = vst [vmem:[#allocation7 + $0xa8] sm:$0xff] %v928
    %961 = vst [vmem:[#allocation7 + $0xb0] sm:$0xff] %v929
    %962 = vst [vmem:[#allocation7 + $0xb8] sm:$0xff] %v930
    %963 = vst [vmem:[#allocation7 + $0xc0] sm:$0xff] %v931
    %964 = vst [vmem:[#allocation7 + $0xc8] sm:$0xff] %v932
    %965 = vst [vmem:[#allocation7 + $0xd0] sm:$0xff] %v933
    %966 = vst [vmem:[#allocation7 + $0xd8] sm:$0xff] %v934
    %967 = vst [vmem:[#allocation7 + $0xe0] sm:$0xff] %v935
    %968 = vst [vmem:[#allocation7 + $0xe8] sm:$0xff] %v936
    %969 = vst [vmem:[#allocation7 + $0xf0] sm:$0xff] %v937
    %970 = vst [vmem:[#allocation7 + $0xf8] sm:$0xff] %v938
    // Predicated region
    $region22: #{residual_block_forward.1} parent=1 // pred_check
      _
    $region23: #{residual_block_forward.1} parent=1 // pred_check_branch
      %972 = sbr.rel (0) target = $region25
    $region24: #{residual_block_forward.1} parent=1 // pred_region
      %s974 = ssub.s32 4096, 4096
      %975 = vsyncadd [#allocation4], %s974
      %s976 = sshll.u32 [#allocation7], 4
      %s977 = int_to_ptr.vmem [resolvable:$true] %s976
      %982 = dma.vmem_to_hbm [thread:$0]  %s977, 4096, %s3, [#allocation4], 128, 128, 8
    $region25: #{residual_block_forward.1} parent=1 // pred_fallthru
      _
    // Predicated region
    $region26: #{residual_block_forward.1} parent=1 // pred_check
      _
    $region27: #{residual_block_forward.1} parent=1 // pred_check_branch
      %984 = sbr.rel (0) target = $region29
    $region28: #{residual_block_forward.1} parent=1 // pred_region
      %985 = dma.done [#allocation4], 4096
    $region29: #{residual_block_forward.1} parent=1 // pred_fallthru
      _
    %986 = vsyncpa [#allocation3], 1
    %987 = vsyncpa [#allocation6], 1
    %988 = vsyncpa [#allocation4], 1

</llo_original>
